<compile_context>
chip_gen: v7x
topology: tpu7x:2x2x1
jax: 0.10.0
libtpu: 0.0.40
codegen_flags: <defaults>
</compile_context>

<pallas_src>
import jax
import jax.numpy as jnp
from jax.experimental import pallas as pl
from jax.experimental.pallas import tpu as pltpu

NUM_CLASSES = 90
NUM_PATTERN = 89
IGNORE_INDEX = 999


def _trans_inv_loss_kernel(first_scores_ref, pattern_scores_ref,
                           pattern_targs_ref, first_targs_ref, row_valid_ref,
                           losses_ref):
    fs = first_scores_ref[...].astype(jnp.float32)    # (T, C)
    ps = pattern_scores_ref[...].astype(jnp.float32)  # (T, K)
    pt = pattern_targs_ref[...].astype(jnp.float32)   # (T, K)
    ft = first_targs_ref[...]                         # (T, 1) int32
    rv = row_valid_ref[...]                           # (T, 1) int32 (l < lengths[b])

    T, C = fs.shape
    K = ps.shape[-1]

    # ---- nn.CrossEntropyLoss(reduction='none', ignore_index=999) ----
    # Only the target logit is needed: ce = logsumexp(z) - z[target]
    # (z is already max-shifted, so the shift cancels).
    m = jnp.max(fs, axis=-1, keepdims=True)                              # (T, 1)
    z = fs - m                                                           # (T, C)
    lse = jnp.log(jnp.sum(jnp.exp(z), axis=-1, keepdims=True))           # (T, 1)
    cls = jax.lax.broadcasted_iota(jnp.int32, (T, C), 1)
    tgt = jnp.sum(jnp.where(cls == ft, z, 0.0), axis=-1, keepdims=True)  # (T, 1)
    ce = jnp.where(ft != IGNORE_INDEX, lse - tgt, 0.0)                   # ignore_index -> 0

    # ---- masked element-wise binary cross entropy (two-term, matches torch) ----
    eps = 1e-28
    pat = -(pt * jnp.log(ps + eps) + (1.0 - pt) * jnp.log(1.0 - ps + eps))  # (T, K)

    # trans-invariance mask: keep k < 89 - first_targs  (999 -> negative -> all off)
    kid = jax.lax.broadcasted_iota(jnp.int32, (T, K), 1)
    pat = jnp.where(kid < (K - ft), pat, 0.0)                            # (T, K)
    psum = jnp.sum(pat, axis=-1, keepdims=True)                          # (T, 1)
    psum = jnp.where(rv != 0, psum, 0.0)                                 # length mask

    losses_ref[...] = ce + psum                                          # (T, 1)


def trans_inv_loss(first_scores, pattern_scores, first_targs, pattern_targs,
                   lengths, reduce=True):
    L, B, C = first_scores.shape
    K = pattern_scores.shape[-1]
    N = L * B

    # Flatten (L, B, ...) -> (N, ...): free metadata reshapes, big operands keep
    # their native dtype (upcast happens inside the kernel).
    fs = first_scores.reshape(N, C)
    ps = pattern_scores.reshape(N, K)
    pt = pattern_targs.reshape(N, K)
    ft = first_targs.reshape(N, 1).astype(jnp.int32)

    # row_valid[l*B + b] = l < lengths[b]   (tiny (N,1) int32 array)
    l_idx = jnp.arange(L, dtype=jnp.int32)[:, None]
    rv = (l_idx < lengths.reshape(1, B).astype(jnp.int32)).astype(jnp.int32)
    rv = rv.reshape(N, 1)

    # Single block for small problems; 512-row tiles (multiple of 8) otherwise.
    tile = N if N <= 1024 else 512
    grid = (pl.cdiv(N, tile),)

    losses_flat = pl.pallas_call(
        _trans_inv_loss_kernel,
        out_shape=jax.ShapeDtypeStruct((N, 1), jnp.float32),
        grid=grid,
        in_specs=[
            pl.BlockSpec((tile, C), lambda i: (i, 0)),
            pl.BlockSpec((tile, K), lambda i: (i, 0)),
            pl.BlockSpec((tile, K), lambda i: (i, 0)),
            pl.BlockSpec((tile, 1), lambda i: (i, 0)),
            pl.BlockSpec((tile, 1), lambda i: (i, 0)),
        ],
        out_specs=pl.BlockSpec((tile, 1), lambda i: (i, 0)),
        compiler_params=pltpu.CompilerParams(
            dimension_semantics=("parallel",)),
    )(fs, ps, pt, ft, rv)

    if reduce:
        # Final scalar reduction fuses into the surrounding XLA graph.
        return jnp.sum(losses_flat) / B
    return losses_flat.reshape(L, B)


if __name__ == "__main__":
    key = jax.random.PRNGKey(0)
    L, B = 8, 4                                  # max_length=8, batch_size=4
    k1, k2, k3, k4, k5 = jax.random.split(key, 5)

    first_scores = jax.random.normal(k1, (L, B, NUM_CLASSES), jnp.float32)
    pattern_scores = jax.nn.sigmoid(
        jax.random.normal(k2, (L, B, NUM_PATTERN), jnp.float32))
    first_targs = jax.random.randint(k3, (L, B), 0, NUM_CLASSES, jnp.int32)
    # exercise ignore_index like the PyTorch CrossEntropyLoss setup
    first_targs = first_targs.at[L - 1, 0].set(IGNORE_INDEX)
    pattern_targs = jax.random.bernoulli(
        k4, 0.3, (L, B, NUM_PATTERN)).astype(jnp.float32)
    lengths = jax.random.randint(k5, (B,), 1, L + 1, jnp.int32)

    loss = trans_inv_loss(first_scores, pattern_scores, first_targs,
                          pattern_targs, lengths, reduce=True)
    losses = trans_inv_loss(first_scores, pattern_scores, first_targs,
                            pattern_targs, lengths, reduce=False)
    jax.block_until_ready((loss, losses))
    print("KERNEL_OK")
</pallas_src>

<mosaic_0001>
module attributes {stable_mosaic.version = 11 : i64} {
  func.func @_trans_inv_loss_kernel(%arg0: i32, %arg1: memref<32x90xf32, #tpu.memory_space<vmem>>, %arg2: memref<32x89xf32, #tpu.memory_space<vmem>>, %arg3: memref<32x89xf32, #tpu.memory_space<vmem>>, %arg4: memref<32x1xi32, #tpu.memory_space<vmem>>, %arg5: memref<32x1xi32, #tpu.memory_space<vmem>>, %arg6: memref<32x1xf32, #tpu.memory_space<vmem>>) attributes {dimension_semantics = [#tpu.dimension_semantics<parallel>], iteration_bounds = array<i64: 1>, scalar_prefetch = 0 : i64, scratch_operands = 0 : i64, tpu.core_type = #tpu.core_type<tc>, window_params = [{transform_indices = @transform_0, window_bounds = array<i64: 32, 90>}, {transform_indices = @transform_1, window_bounds = array<i64: 32, 89>}, {transform_indices = @transform_2, window_bounds = array<i64: 32, 89>}, {transform_indices = @transform_3, window_bounds = array<i64: 32, 1>}, {transform_indices = @transform_4, window_bounds = array<i64: 32, 1>}, {transform_indices = @transform_5, window_bounds = array<i64: 32, 1>}]} {
    %c0 = arith.constant 0 : index
    %c0_0 = arith.constant 0 : index
    %0 = vector.load %arg1[%c0, %c0_0] : memref<32x90xf32, #tpu.memory_space<vmem>>, vector<32x90xf32>
    %c0_1 = arith.constant 0 : index
    %c0_2 = arith.constant 0 : index
    %1 = vector.load %arg2[%c0_1, %c0_2] : memref<32x89xf32, #tpu.memory_space<vmem>>, vector<32x89xf32>
    %c0_3 = arith.constant 0 : index
    %c0_4 = arith.constant 0 : index
    %2 = vector.load %arg3[%c0_3, %c0_4] : memref<32x89xf32, #tpu.memory_space<vmem>>, vector<32x89xf32>
    %c0_5 = arith.constant 0 : index
    %c0_6 = arith.constant 0 : index
    %3 = vector.load %arg4[%c0_5, %c0_6] : memref<32x1xi32, #tpu.memory_space<vmem>>, vector<32x1xi32>
    %c0_7 = arith.constant 0 : index
    %c0_8 = arith.constant 0 : index
    %4 = vector.load %arg5[%c0_7, %c0_8] : memref<32x1xi32, #tpu.memory_space<vmem>>, vector<32x1xi32>
    %cst = arith.constant dense<0xFF800000> : vector<32xf32>
    %5 = vector.multi_reduction <maximumf>, %0, %cst [1] : vector<32x90xf32> to vector<32xf32>
    %6 = vector.shape_cast %5 : vector<32xf32> to vector<32x1xf32>
    %7 = vector.broadcast %6 : vector<32x1xf32> to vector<32x90xf32>
    %8 = arith.subf %0, %7 : vector<32x90xf32>
    %9 = math.exp %8 : vector<32x90xf32>
    %cst_9 = arith.constant dense<0.000000e+00> : vector<32xf32>
    %10 = vector.multi_reduction <add>, %9, %cst_9 [1] : vector<32x90xf32> to vector<32xf32>
    %11 = vector.shape_cast %10 : vector<32xf32> to vector<32x1xf32>
    %12 = math.log %11 : vector<32x1xf32>
    %13 = tpu.iota {dimensions = array<i32: 1>} : vector<32x90xi32>
    %14 = vector.broadcast %3 : vector<32x1xi32> to vector<32x90xi32>
    %15 = arith.cmpi eq, %13, %14 : vector<32x90xi32>
    %cst_10 = arith.constant 0.000000e+00 : f32
    %16 = vector.broadcast %cst_10 : f32 to vector<32x90xf32>
    %17 = arith.select %15, %8, %16 : vector<32x90xi1>, vector<32x90xf32>
    %cst_11 = arith.constant dense<0.000000e+00> : vector<32xf32>
    %18 = vector.multi_reduction <add>, %17, %cst_11 [1] : vector<32x90xf32> to vector<32xf32>
    %19 = vector.shape_cast %18 : vector<32xf32> to vector<32x1xf32>
    %c999_i32 = arith.constant 999 : i32
    %20 = vector.broadcast %c999_i32 : i32 to vector<32x1xi32>
    %21 = arith.cmpi ne, %3, %20 : vector<32x1xi32>
    %22 = arith.subf %12, %19 : vector<32x1xf32>
    %cst_12 = arith.constant 0.000000e+00 : f32
    %23 = vector.broadcast %cst_12 : f32 to vector<32x1xf32>
    %24 = arith.select %21, %22, %23 : vector<32x1xi1>, vector<32x1xf32>
    %cst_13 = arith.constant 1.000000e-28 : f32
    %25 = vector.broadcast %cst_13 : f32 to vector<32x89xf32>
    %26 = arith.addf %1, %25 : vector<32x89xf32>
    %27 = math.log %26 : vector<32x89xf32>
    %28 = arith.mulf %2, %27 : vector<32x89xf32>
    %cst_14 = arith.constant 1.000000e+00 : f32
    %29 = vector.broadcast %cst_14 : f32 to vector<32x89xf32>
    %30 = arith.subf %29, %2 : vector<32x89xf32>
    %cst_15 = arith.constant 1.000000e+00 : f32
    %31 = vector.broadcast %cst_15 : f32 to vector<32x89xf32>
    %32 = arith.subf %31, %1 : vector<32x89xf32>
    %cst_16 = arith.constant 1.000000e-28 : f32
    %33 = vector.broadcast %cst_16 : f32 to vector<32x89xf32>
    %34 = arith.addf %32, %33 : vector<32x89xf32>
    %35 = math.log %34 : vector<32x89xf32>
    %36 = arith.mulf %30, %35 : vector<32x89xf32>
    %37 = arith.addf %28, %36 : vector<32x89xf32>
    %cst_17 = arith.constant 0.000000e+00 : f32
    %38 = vector.broadcast %cst_17 : f32 to vector<32x89xf32>
    %39 = arith.subf %38, %37 : vector<32x89xf32>
    %40 = tpu.iota {dimensions = array<i32: 1>} : vector<32x89xi32>
    %c89_i32 = arith.constant 89 : i32
    %41 = vector.broadcast %c89_i32 : i32 to vector<32x1xi32>
    %42 = arith.subi %41, %3 : vector<32x1xi32>
    %43 = vector.broadcast %42 : vector<32x1xi32> to vector<32x89xi32>
    %44 = arith.cmpi slt, %40, %43 : vector<32x89xi32>
    %cst_18 = arith.constant 0.000000e+00 : f32
    %45 = vector.broadcast %cst_18 : f32 to vector<32x89xf32>
    %46 = arith.select %44, %39, %45 : vector<32x89xi1>, vector<32x89xf32>
    %cst_19 = arith.constant dense<0.000000e+00> : vector<32xf32>
    %47 = vector.multi_reduction <add>, %46, %cst_19 [1] : vector<32x89xf32> to vector<32xf32>
    %48 = vector.shape_cast %47 : vector<32xf32> to vector<32x1xf32>
    %c0_i32 = arith.constant 0 : i32
    %49 = vector.broadcast %c0_i32 : i32 to vector<32x1xi32>
    %50 = arith.cmpi ne, %4, %49 : vector<32x1xi32>
    %cst_20 = arith.constant 0.000000e+00 : f32
    %51 = vector.broadcast %cst_20 : f32 to vector<32x1xf32>
    %52 = arith.select %50, %48, %51 : vector<32x1xi1>, vector<32x1xf32>
    %53 = arith.addf %24, %52 : vector<32x1xf32>
    %c0_21 = arith.constant 0 : index
    %c0_22 = arith.constant 0 : index
    %54 = vector.load %arg6[%c0_21, %c0_22] : memref<32x1xf32, #tpu.memory_space<vmem>>, vector<32x1xf32>
    tpu.vector_store %arg6[%c0_21, %c0_22], %53 {strides = array<i32>} : memref<32x1xf32, #tpu.memory_space<vmem>>, vector<32x1xf32>,
    return
  }
  func.func @transform_0(%arg0: i32) -> (i32, i32) {
    %c0_i32 = arith.constant 0 : i32
    %c0_i32_0 = arith.constant 0 : i32
    return %arg0, %c0_i32 : i32, i32
  }
  func.func @transform_1(%arg0: i32) -> (i32, i32) {
    %c0_i32 = arith.constant 0 : i32
    %c0_i32_0 = arith.constant 0 : i32
    return %arg0, %c0_i32 : i32, i32
  }
  func.func @transform_2(%arg0: i32) -> (i32, i32) {
    %c0_i32 = arith.constant 0 : i32
    %c0_i32_0 = arith.constant 0 : i32
    return %arg0, %c0_i32 : i32, i32
  }
  func.func @transform_3(%arg0: i32) -> (i32, i32) {
    %c0_i32 = arith.constant 0 : i32
    %c0_i32_0 = arith.constant 0 : i32
    return %arg0, %c0_i32 : i32, i32
  }
  func.func @transform_4(%arg0: i32) -> (i32, i32) {
    %c0_i32 = arith.constant 0 : i32
    %c0_i32_0 = arith.constant 0 : i32
    return %arg0, %c0_i32 : i32, i32
  }
  func.func @transform_5(%arg0: i32) -> (i32, i32) {
    %c0_i32 = arith.constant 0 : i32
    %c0_i32_0 = arith.constant 0 : i32
    return %arg0, %c0_i32 : i32, i32
  }
}

</mosaic_0001>

<llo_original>
// kernel: tpu_custom_call.1
$region0: #{tpu_custom_call.1}
  #allocation0 [shape = 'u32[]', space=smem, size = 0x4, offset = 0x4, fixed_abs, tag = 'smem constant byte address 0x4 - core index']
  #allocation1 [shape = 'u32[144,128]{1,0:T(1,128)}', space=vmem, size = 0x12000, scoped, tag = 'internal scratch']
  %s0 = inlined_call_operand.vmem [shape: f32[32,90], index: 0, kind: input, shape index: {}]
  %s1 = inlined_call_operand.vmem [shape: f32[32,89], index: 1, kind: input, shape index: {}]
  %s2 = inlined_call_operand.hbm [shape: f32[32,89], index: 2, kind: input, shape index: {}]
  %s3 = inlined_call_operand.vmem [shape: s32[32,1], index: 3, kind: input, shape index: {}]
  %s4 = inlined_call_operand.vmem [shape: s32[32,1], index: 4, kind: input, shape index: {}]
  %s5 = inlined_call_operand.vmem [shape: f32[32,1], index: 5, kind: output, shape index: {}]
  %s6 = sld [smem:[#allocation0]]
  $region34: #{tpu_custom_call.1} parent=0
    _
  %s8 = ssub.s32 1, %s6
  %s9 = scalar_select 0, %s8, %s6
  $region1: #{tpu_custom_call.1} parent=0
    #allocation2 [shape = 'u8[16384]{0}', space=vmem, size = 0x4000, scoped, tag = 'input window, operand 2, single buffered']
    #allocation3 [shape = 's32[1]{0}', space=sflag, size = 0x4, scoped, tag = 'scoped memory for tpu_custom_call.1']
    %10 = vsyncpa [#allocation3], 0
    // Predicated region
    $region2: #{tpu_custom_call.1} parent=1 // pred_check
      _
    $region3: #{tpu_custom_call.1} parent=1 // pred_check_branch
      %12 = sbr.rel (0) target = $region5
    $region4: #{tpu_custom_call.1} parent=1 // pred_region
      _
    $region5: #{tpu_custom_call.1} parent=1 // pred_fallthru
      _
    // Predicated region
    $region6: #{tpu_custom_call.1} parent=1 // pred_check
      _
    $region7: #{tpu_custom_call.1} parent=1 // pred_check_branch
      %14 = sbr.rel (0) target = $region9
    $region8: #{tpu_custom_call.1} parent=1 // pred_region
      _
    $region9: #{tpu_custom_call.1} parent=1 // pred_fallthru
      _
    // Predicated region
    $region10: #{tpu_custom_call.1} parent=1 // pred_check
      _
    $region11: #{tpu_custom_call.1} parent=1 // pred_check_branch
      %16 = sbr.rel (0) target = $region13
    $region12: #{tpu_custom_call.1} parent=1 // pred_region
      %s18 = ssub.s32 512, 512
      %19 = vsyncadd [#allocation3], %s18
      %s20 = sshll.u32 [#allocation2], 4
      %s21 = int_to_ptr.vmem [resolvable:$true] %s20
      %26 = dma.hbm_to_vmem [thread:$0]  %s2, 512, %s21, [#allocation3], 128, 128, 8
    $region13: #{tpu_custom_call.1} parent=1 // pred_fallthru
      _
    // Predicated region
    $region14: #{tpu_custom_call.1} parent=1 // pred_check
      _
    $region15: #{tpu_custom_call.1} parent=1 // pred_check_branch
      %28 = sbr.rel (0) target = $region17
    $region16: #{tpu_custom_call.1} parent=1 // pred_region
      _
    $region17: #{tpu_custom_call.1} parent=1 // pred_fallthru
      _
    // Predicated region
    $region18: #{tpu_custom_call.1} parent=1 // pred_check
      _
    $region19: #{tpu_custom_call.1} parent=1 // pred_check_branch
      %30 = sbr.rel (0) target = $region21
    $region20: #{tpu_custom_call.1} parent=1 // pred_region
      _
    $region21: #{tpu_custom_call.1} parent=1 // pred_fallthru
      _
    // Predicated region
    $region22: #{tpu_custom_call.1} parent=1 // pred_check
      _
    $region23: #{tpu_custom_call.1} parent=1 // pred_check_branch
      %32 = sbr.rel (0) target = $region25
    $region24: #{tpu_custom_call.1} parent=1 // pred_region
      %33 = dma.done [#allocation3], 512
    $region25: #{tpu_custom_call.1} parent=1 // pred_fallthru
      _
    %v34 = vld [vmem:[%s0] sm:$0xff]
    %v35 = vld [vmem:[%s0 + $0x8] sm:$0xff]
    %v36 = vld [vmem:[%s0 + $0x10] sm:$0xff]
    %v37 = vld [vmem:[%s0 + $0x18] sm:$0xff]
    %v38 = vld [vmem:[%s1] sm:$0xff]
    %v39 = vld [vmem:[%s1 + $0x8] sm:$0xff]
    %v40 = vld [vmem:[%s1 + $0x10] sm:$0xff]
    %v41 = vld [vmem:[%s1 + $0x18] sm:$0xff]
    %v42 = vld [vmem:[#allocation2] sm:$0xff]
    %v43 = vld [vmem:[#allocation2 + $0x8] sm:$0xff]
    %v44 = vld [vmem:[#allocation2 + $0x10] sm:$0xff]
    %v45 = vld [vmem:[#allocation2 + $0x18] sm:$0xff]
    %v46 = vld [vmem:[%s3] sm:$0xff]
    %v47 = vld [vmem:[%s3 + $0x8] sm:$0xff]
    %v48 = vld [vmem:[%s3 + $0x10] sm:$0xff]
    %v49 = vld [vmem:[%s3 + $0x18] sm:$0xff]
    %v50 = vld [vmem:[%s4] sm:$0xff]
    %v51 = vld [vmem:[%s4 + $0x8] sm:$0xff]
    %v52 = vld [vmem:[%s4 + $0x10] sm:$0xff]
    %v53 = vld [vmem:[%s4 + $0x18] sm:$0xff]
    %vm54 = vcmask 736256
    %v55 = vsel %vm54, %v34, -inf
    %56 = vmax.xlane.f32.xlu0 %v55
    %v57 = vpop.xlane.xlu0 %56
    %v58 = vsel %vm54, %v35, -inf
    %59 = vmax.xlane.f32.xlu0 %v58
    %v60 = vpop.xlane.xlu0 %59
    %v61 = vsel %vm54, %v36, -inf
    %62 = vmax.xlane.f32.xlu0 %v61
    %v63 = vpop.xlane.xlu0 %62
    %v64 = vsel %vm54, %v37, -inf
    %65 = vmax.xlane.f32.xlu0 %v64
    %v66 = vpop.xlane.xlu0 %65
    %v67 = vsub.f32 %v34, %v57
    %v68 = vsub.f32 %v35, %v60
    %v69 = vsub.f32 %v36, %v63
    %v70 = vsub.f32 %v37, %v66
    %v71 = vmul.f32 %v67, 1.442695
    %v72 = vpow.pop %v71
    %v73 = vmul.f32 %v68, 1.442695
    %v74 = vpow.pop %v73
    %v75 = vmul.f32 %v69, 1.442695
    %v76 = vpow.pop %v75
    %v77 = vmul.f32 %v70, 1.442695
    %v78 = vpow.pop %v77
    %v79 = vsel %vm54, %v72, 0.0
    %80 = vadd.xlane.f32.xlu0 %v79
    %v81 = vpop.xlane.xlu0 %80
    %v82 = vsel %vm54, %v74, 0.0
    %83 = vadd.xlane.f32.xlu0 %v82
    %v84 = vpop.xlane.xlu0 %83
    %v85 = vsel %vm54, %v76, 0.0
    %86 = vadd.xlane.f32.xlu0 %v85
    %v87 = vpop.xlane.xlu0 %86
    %v88 = vsel %vm54, %v78, 0.0
    %89 = vadd.xlane.f32.xlu0 %v88
    %v90 = vpop.xlane.xlu0 %89
    %v91 = vlog2.pop %v81
    %v92 = vmul.f32 %v91, 0.6931472
    %v93 = vlog2.pop %v84
    %v94 = vmul.f32 %v93, 0.6931472
    %v95 = vlog2.pop %v87
    %v96 = vmul.f32 %v95, 0.6931472
    %v97 = vlog2.pop %v90
    %v98 = vmul.f32 %v97, 0.6931472
    %v99 = vlaneseq
    %v100 = vand.u32 %v99, 127
    %101 = vset.pattern.permute.xlu0 0
    %102 = vperm.xlu0 %101, %v46
    %v103 = vpop.permute.xlu0 %102
    %104 = vset.pattern.permute.xlu0 0
    %105 = vperm.xlu0 %104, %v47
    %v106 = vpop.permute.xlu0 %105
    %107 = vset.pattern.permute.xlu0 0
    %108 = vperm.xlu0 %107, %v48
    %v109 = vpop.permute.xlu0 %108
    %110 = vset.pattern.permute.xlu0 0
    %111 = vperm.xlu0 %110, %v49
    %v112 = vpop.permute.xlu0 %111
    %vm113 = vcmp.eq.s32.totalorder %v100, %v103
    %vm114 = vcmp.eq.s32.totalorder %v100, %v106
    %vm115 = vcmp.eq.s32.totalorder %v100, %v109
    %vm116 = vcmp.eq.s32.totalorder %v100, %v112
    %v117 = vsel %vm113, %v67, 0.0
    %v118 = vsel %vm114, %v68, 0.0
    %v119 = vsel %vm115, %v69, 0.0
    %v120 = vsel %vm116, %v70, 0.0
    %v121 = vsel %vm54, %v117, 0.0
    %122 = vadd.xlane.f32.xlu0 %v121
    %v123 = vpop.xlane.xlu0 %122
    %v124 = vsel %vm54, %v118, 0.0
    %125 = vadd.xlane.f32.xlu0 %v124
    %v126 = vpop.xlane.xlu0 %125
    %v127 = vsel %vm54, %v119, 0.0
    %128 = vadd.xlane.f32.xlu0 %v127
    %v129 = vpop.xlane.xlu0 %128
    %v130 = vsel %vm54, %v120, 0.0
    %131 = vadd.xlane.f32.xlu0 %v130
    %v132 = vpop.xlane.xlu0 %131
    %vm133 = vcmp.ne.s32.totalorder %v46, 999
    %vm134 = vcmp.ne.s32.totalorder %v47, 999
    %vm135 = vcmp.ne.s32.totalorder %v48, 999
    %vm136 = vcmp.ne.s32.totalorder %v49, 999
    %v137 = vsub.f32 %v92, %v123
    %v138 = vsub.f32 %v94, %v126
    %v139 = vsub.f32 %v96, %v129
    %v140 = vsub.f32 %v98, %v132
    %v141 = vsel %vm133, %v137, 0.0
    %v142 = vsel %vm134, %v138, 0.0
    %v143 = vsel %vm135, %v139, 0.0
    %v144 = vsel %vm136, %v140, 0.0
    %v145 = vadd.f32 %v38, 1e-28
    %v146 = vadd.f32 %v39, 1e-28
    %v147 = vadd.f32 %v40, 1e-28
    %v148 = vadd.f32 %v41, 1e-28
    %v149 = vlog2.pop %v145
    %v150 = vmul.f32 %v149, 0.6931472
    %v151 = vlog2.pop %v146
    %v152 = vmul.f32 %v151, 0.6931472
    %v153 = vlog2.pop %v147
    %v154 = vmul.f32 %v153, 0.6931472
    %v155 = vlog2.pop %v148
    %v156 = vmul.f32 %v155, 0.6931472
    %v157 = vmul.f32 %v42, %v150
    %v158 = vmul.f32 %v43, %v152
    %v159 = vmul.f32 %v44, %v154
    %v160 = vmul.f32 %v45, %v156
    %v161 = vsub.f32 1.0, %v42
    %v162 = vsub.f32 1.0, %v43
    %v163 = vsub.f32 1.0, %v44
    %v164 = vsub.f32 1.0, %v45
    %v165 = vsub.f32 1.0, %v38
    %v166 = vsub.f32 1.0, %v39
    %v167 = vsub.f32 1.0, %v40
    %v168 = vsub.f32 1.0, %v41
    %v169 = vadd.f32 %v165, 1e-28
    %v170 = vadd.f32 %v166, 1e-28
    %v171 = vadd.f32 %v167, 1e-28
    %v172 = vadd.f32 %v168, 1e-28
    %v173 = vlog2.pop %v169
    %v174 = vmul.f32 %v173, 0.6931472
    %v175 = vlog2.pop %v170
    %v176 = vmul.f32 %v175, 0.6931472
    %v177 = vlog2.pop %v171
    %v178 = vmul.f32 %v177, 0.6931472
    %v179 = vlog2.pop %v172
    %v180 = vmul.f32 %v179, 0.6931472
    %v181 = vmul.f32 %v161, %v174
    %v182 = vmul.f32 %v162, %v176
    %v183 = vmul.f32 %v163, %v178
    %v184 = vmul.f32 %v164, %v180
    %v185 = vadd.f32 %v157, %v181
    %v186 = vadd.f32 %v158, %v182
    %v187 = vadd.f32 %v159, %v183
    %v188 = vadd.f32 %v160, %v184
    %v189 = vsub.f32 0.0, %v185
    %v190 = vsub.f32 0.0, %v186
    %v191 = vsub.f32 0.0, %v187
    %v192 = vsub.f32 0.0, %v188
    %v193 = vsub.s32 89, %v46
    %v194 = vsub.s32 89, %v47
    %v195 = vsub.s32 89, %v48
    %v196 = vsub.s32 89, %v49
    %197 = vset.pattern.permute.xlu0 0
    %198 = vperm.xlu0 %197, %v193
    %v199 = vpop.permute.xlu0 %198
    %200 = vset.pattern.permute.xlu0 0
    %201 = vperm.xlu0 %200, %v194
    %v202 = vpop.permute.xlu0 %201
    %203 = vset.pattern.permute.xlu0 0
    %204 = vperm.xlu0 %203, %v195
    %v205 = vpop.permute.xlu0 %204
    %206 = vset.pattern.permute.xlu0 0
    %207 = vperm.xlu0 %206, %v196
    %v208 = vpop.permute.xlu0 %207
    %vm209 = vcmp.lt.s32.totalorder %v100, %v199
    %vm210 = vcmp.lt.s32.totalorder %v100, %v202
    %vm211 = vcmp.lt.s32.totalorder %v100, %v205
    %vm212 = vcmp.lt.s32.totalorder %v100, %v208
    %v213 = vsel %vm209, %v189, 0.0
    %v214 = vsel %vm210, %v190, 0.0
    %v215 = vsel %vm211, %v191, 0.0
    %v216 = vsel %vm212, %v192, 0.0
    %vm217 = vcmask 728064
    %v218 = vsel %vm217, %v213, 0.0
    %219 = vadd.xlane.f32.xlu0 %v218
    %v220 = vpop.xlane.xlu0 %219
    %v221 = vsel %vm217, %v214, 0.0
    %222 = vadd.xlane.f32.xlu0 %v221
    %v223 = vpop.xlane.xlu0 %222
    %v224 = vsel %vm217, %v215, 0.0
    %225 = vadd.xlane.f32.xlu0 %v224
    %v226 = vpop.xlane.xlu0 %225
    %v227 = vsel %vm217, %v216, 0.0
    %228 = vadd.xlane.f32.xlu0 %v227
    %v229 = vpop.xlane.xlu0 %228
    %vm230 = vcmp.ne.s32.totalorder %v50, 0
    %vm231 = vcmp.ne.s32.totalorder %v51, 0
    %vm232 = vcmp.ne.s32.totalorder %v52, 0
    %vm233 = vcmp.ne.s32.totalorder %v53, 0
    %v234 = vsel %vm230, %v220, 0.0
    %v235 = vsel %vm231, %v223, 0.0
    %v236 = vsel %vm232, %v226, 0.0
    %v237 = vsel %vm233, %v229, 0.0
    %v238 = vadd.f32 %v141, %v234
    %v239 = vadd.f32 %v142, %v235
    %v240 = vadd.f32 %v143, %v236
    %v241 = vadd.f32 %v144, %v237
    %vm242 = vcmask 7168
    %243 = vst.msk [vmem:[%s5] sm:$0xff] %vm242, %v238
    %244 = vst.msk [vmem:[%s5 + $0x8] sm:$0xff] %vm242, %v239
    %245 = vst.msk [vmem:[%s5 + $0x10] sm:$0xff] %vm242, %v240
    %246 = vst.msk [vmem:[%s5 + $0x18] sm:$0xff] %vm242, %v241
    // Predicated region
    $region26: #{tpu_custom_call.1} parent=1 // pred_check
      _
    $region27: #{tpu_custom_call.1} parent=1 // pred_check_branch
      %248 = sbr.rel (0) target = $region29
    $region28: #{tpu_custom_call.1} parent=1 // pred_region
      _
    $region29: #{tpu_custom_call.1} parent=1 // pred_fallthru
      _
    // Predicated region
    $region30: #{tpu_custom_call.1} parent=1 // pred_check
      _
    $region31: #{tpu_custom_call.1} parent=1 // pred_check_branch
      %250 = sbr.rel (0) target = $region33
    $region32: #{tpu_custom_call.1} parent=1 // pred_region
      _
    $region33: #{tpu_custom_call.1} parent=1 // pred_fallthru
      _
    %251 = vsyncpa [#allocation3], 1

</llo_original>
